<compile_context>
chip_gen: v6e
topology: v6e:2x2x1
jax: 0.10.0
libtpu: 0.0.40
codegen_flags: <defaults>
</compile_context>

<pallas_src>
import math
import functools

import jax
import jax.numpy as jnp
import numpy as np
from jax.experimental import pallas as pl
from jax.experimental.pallas import tpu as pltpu


def _timestep_embedder_kernel(t_ref, freqs_ref, w1c_ref, w1s_ref, b1_ref,
                              w2_ref, b2_ref, out_ref):
    # t_ref:     (N, 1)       f32   (resident)
    # freqs_ref: (1, half)    f32   (resident)
    # w1c_ref:   (half, H)    bf16  (resident; rows [0:half]  of w1)
    # w1s_ref:   (half, H)    bf16  (resident; rows [half:2h] of w1)
    # b1_ref:    (1, H)       bf16  (resident)
    # w2_ref:    (H, TILE_N)  bf16  (streamed column tile)
    # b2_ref:    (1, TILE_N)  bf16  (streamed column tile)
    # out_ref:   (N, TILE_N)  f32   (column tile)
    args = t_ref[...] * freqs_ref[...]                    # (N, half) f32
    cos_e = jnp.cos(args).astype(jnp.bfloat16)
    sin_e = jnp.sin(args).astype(jnp.bfloat16)

    # First Linear without the lane-axis concat: split-K over cos/sin halves.
    h = (jnp.dot(cos_e, w1c_ref[...], preferred_element_type=jnp.float32)
         + jnp.dot(sin_e, w1s_ref[...], preferred_element_type=jnp.float32)
         + b1_ref[...].astype(jnp.float32))
    h = h * jax.nn.sigmoid(h)                             # SiLU in f32 (EUP)

    out = (jnp.dot(h.astype(jnp.bfloat16), w2_ref[...],
                   preferred_element_type=jnp.float32)
           + b2_ref[...].astype(jnp.float32))
    out_ref[...] = out.astype(out_ref.dtype)


def _resident(shape):
    # Same block every grid step -> loaded once, kept VMEM-resident.
    return pl.BlockSpec(shape, lambda *_: (0,) * len(shape))


@functools.partial(jax.jit, static_argnames=("hidden_size", "freq_dim", "tile_n"))
def timestep_embedder(t, params, *, hidden_size, freq_dim=256, tile_n=None):
    """t: (N,) float timesteps. params = (w1, b1, w2, b2) in (in, out) layout.

    Returns (N, hidden_size) float32.
    """
    assert freq_dim % 2 == 0, "odd frequency_embedding_size not supported"
    # TODO(synk): PyTorch's zero-pad branch for odd frequency_embedding_size is
    # intentionally omitted (asserted even, as in the default config of 256).
    assert hidden_size % 128 == 0, "hidden_size must be a multiple of 128"

    n = t.shape[0]
    half = freq_dim // 2

    if tile_n is None:
        # Largest multiple of 128 that divides hidden_size, capped at 512 so
        # 2 x bf16 (H, TILE_N) buffers stay small even for H ~ 4096.
        tile_n = min(hidden_size, 512)
        while hidden_size % tile_n:
            tile_n -= 128
    assert tile_n % 128 == 0 and hidden_size % tile_n == 0
    num_tiles = hidden_size // tile_n

    # Tiny constant table + param prep (XLA glue outside the kernel).
    freqs = jnp.exp(
        -math.log(10000.0) * jnp.arange(half, dtype=jnp.float32) / half
    ).reshape(1, half)
    t2d = t.astype(jnp.float32).reshape(n, 1)

    w1, b1, w2, b2 = (p.astype(jnp.bfloat16) for p in params)
    w1_cos = w1[:half]          # (half, H)
    w1_sin = w1[half:]          # (half, H)

    flops = 2 * n * (freq_dim * hidden_size + hidden_size * hidden_size)
    transcendentals = n * (freq_dim + hidden_size)            # cos/sin + sigmoid
    bytes_accessed = (
        2 * (freq_dim * hidden_size + hidden_size * hidden_size + 2 * hidden_size)
        + 4 * n + 4 * n * hidden_size)

    return pl.pallas_call(
        _timestep_embedder_kernel,
        out_shape=jax.ShapeDtypeStruct((n, hidden_size), jnp.float32),
        grid=(num_tiles,),
        in_specs=[
            _resident((n, 1)),                              # t
            _resident((1, half)),                           # freqs
            _resident((half, hidden_size)),                 # w1_cos
            _resident((half, hidden_size)),                 # w1_sin
            _resident((1, hidden_size)),                    # b1
            pl.BlockSpec((hidden_size, tile_n), lambda j: (0, j)),  # w2 tile
            pl.BlockSpec((1, tile_n), lambda j: (0, j)),            # b2 tile
        ],
        out_specs=pl.BlockSpec((n, tile_n), lambda j: (0, j)),
        compiler_params=pltpu.CompilerParams(
            dimension_semantics=("parallel",),
            vmem_limit_bytes=32 * 1024 * 1024,
        ),
        cost_estimate=pl.CostEstimate(
            flops=flops, transcendentals=transcendentals,
            bytes_accessed=bytes_accessed),
    )(t2d, freqs, w1_cos, w1_sin, b1, w2, b2)


def init_params(key, hidden_size, freq_dim=256):
    """Deterministic synthetic params, (in, out) layout, stored as bfloat16."""
    k1, k2, k3, k4 = jax.random.split(key, 4)
    s1 = 1.0 / math.sqrt(freq_dim)
    s2 = 1.0 / math.sqrt(hidden_size)
    w1 = jax.random.uniform(k1, (freq_dim, hidden_size), jnp.float32, -s1, s1)
    b1 = jax.random.uniform(k2, (1, hidden_size), jnp.float32, -s1, s1)
    w2 = jax.random.uniform(k3, (hidden_size, hidden_size), jnp.float32, -s2, s2)
    b2 = jax.random.uniform(k4, (1, hidden_size), jnp.float32, -s2, s2)
    return tuple(p.astype(jnp.bfloat16) for p in (w1, b1, w2, b2))


def reference(t, params, freq_dim=256):
    """Pure-JAX reference mirroring the PyTorch forward for a bf16-weight MLP
    (activations cast to weight dtype before each Linear, f32 accumulation)."""
    half = freq_dim // 2
    freqs = jnp.exp(-math.log(10000.0) * jnp.arange(half, dtype=jnp.float32) / half)
    args = t.astype(jnp.float32)[:, None] * freqs[None]
    emb = jnp.concatenate([jnp.cos(args), jnp.sin(args)], axis=-1)
    w1, b1, w2, b2 = (p.astype(jnp.float32) for p in params)
    h = emb.astype(jnp.bfloat16).astype(jnp.float32) @ w1 + b1
    h = h * jax.nn.sigmoid(h)
    return h.astype(jnp.bfloat16).astype(jnp.float32) @ w2 + b2


if __name__ == "__main__":
    hidden_size = 256
    freq_dim = 256
    batch = 8
    tile_n = 128           # -> grid=(2,): exercises the streamed-w2 path

    key = jax.random.PRNGKey(0)
    kp, kt = jax.random.split(key)
    params = init_params(kp, hidden_size, freq_dim)
    t = jax.random.uniform(kt, (batch,), jnp.float32, 0.0, 1000.0)

    out = timestep_embedder(t, params, hidden_size=hidden_size,
                            freq_dim=freq_dim, tile_n=tile_n)
    out = jax.block_until_ready(out)

    ref = reference(t, params, freq_dim)
    np.testing.assert_allclose(np.asarray(out), np.asarray(ref),
                               rtol=1e-2, atol=1e-2)
    print("KERNEL_OK")
</pallas_src>

<mosaic_0001>
module attributes {stable_mosaic.version = 11 : i64} {
  func.func @_timestep_embedder_kernel(%arg0: i32, %arg1: memref<8x1xf32, #tpu.memory_space<vmem>>, %arg2: memref<1x128xf32, #tpu.memory_space<vmem>>, %arg3: memref<128x256xbf16, #tpu.memory_space<vmem>>, %arg4: memref<128x256xbf16, #tpu.memory_space<vmem>>, %arg5: memref<1x256xbf16, #tpu.memory_space<vmem>>, %arg6: memref<256x128xbf16, #tpu.memory_space<vmem>>, %arg7: memref<1x128xbf16, #tpu.memory_space<vmem>>, %arg8: memref<8x128xf32, #tpu.memory_space<vmem>>) attributes {dimension_semantics = [#tpu.dimension_semantics<parallel>], iteration_bounds = array<i64: 2>, scalar_prefetch = 0 : i64, scratch_operands = 0 : i64, tpu.core_type = #tpu.core_type<tc>, window_params = [{pipeline_mode = #tpu.pipeline_mode<synchronous>, transform_indices = @transform_0, window_bounds = array<i64: 8, 1>}, {pipeline_mode = #tpu.pipeline_mode<synchronous>, transform_indices = @transform_1, window_bounds = array<i64: 1, 128>}, {pipeline_mode = #tpu.pipeline_mode<synchronous>, transform_indices = @transform_2, window_bounds = array<i64: 128, 256>}, {pipeline_mode = #tpu.pipeline_mode<synchronous>, transform_indices = @transform_3, window_bounds = array<i64: 128, 256>}, {pipeline_mode = #tpu.pipeline_mode<synchronous>, transform_indices = @transform_4, window_bounds = array<i64: 1, 256>}, {transform_indices = @transform_5, window_bounds = array<i64: 256, 128>}, {transform_indices = @transform_6, window_bounds = array<i64: 1, 128>}, {transform_indices = @transform_7, window_bounds = array<i64: 8, 128>}]} {
    %c0 = arith.constant 0 : index
    %c0_0 = arith.constant 0 : index
    %0 = vector.load %arg1[%c0, %c0_0] : memref<8x1xf32, #tpu.memory_space<vmem>>, vector<8x1xf32>
    %c0_1 = arith.constant 0 : index
    %c0_2 = arith.constant 0 : index
    %1 = vector.load %arg2[%c0_1, %c0_2] : memref<1x128xf32, #tpu.memory_space<vmem>>, vector<1x128xf32>
    %2 = vector.broadcast %0 : vector<8x1xf32> to vector<8x128xf32>
    %3 = vector.broadcast %1 : vector<1x128xf32> to vector<8x128xf32>
    %4 = arith.mulf %2, %3 : vector<8x128xf32>
    %5 = math.cos %4 : vector<8x128xf32>
    %6 = arith.truncf %5 : vector<8x128xf32> to vector<8x128xbf16>
    %7 = math.sin %4 : vector<8x128xf32>
    %8 = arith.truncf %7 : vector<8x128xf32> to vector<8x128xbf16>
    %c0_3 = arith.constant 0 : index
    %c0_4 = arith.constant 0 : index
    %9 = vector.load %arg3[%c0_3, %c0_4] : memref<128x256xbf16, #tpu.memory_space<vmem>>, vector<128x256xbf16>
    %cst = arith.constant dense<0.000000e+00> : vector<8x256xf32>
    %10 = tpu.matmul %6, %9, %cst {dimension_numbers = #tpu.dot_dimension_numbers<[1], [0], [0], [1], [0, 0, 1, 1], [], []>} : vector<8x128xbf16>, vector<128x256xbf16>, vector<8x256xf32> -> vector<8x256xf32>
    %c0_5 = arith.constant 0 : index
    %c0_6 = arith.constant 0 : index
    %11 = vector.load %arg4[%c0_5, %c0_6] : memref<128x256xbf16, #tpu.memory_space<vmem>>, vector<128x256xbf16>
    %cst_7 = arith.constant dense<0.000000e+00> : vector<8x256xf32>
    %12 = tpu.matmul %8, %11, %cst_7 {dimension_numbers = #tpu.dot_dimension_numbers<[1], [0], [0], [1], [0, 0, 1, 1], [], []>} : vector<8x128xbf16>, vector<128x256xbf16>, vector<8x256xf32> -> vector<8x256xf32>
    %13 = arith.addf %10, %12 : vector<8x256xf32>
    %c0_8 = arith.constant 0 : index
    %c0_9 = arith.constant 0 : index
    %14 = vector.load %arg5[%c0_8, %c0_9] : memref<1x256xbf16, #tpu.memory_space<vmem>>, vector<1x256xbf16>
    %15 = arith.extf %14 : vector<1x256xbf16> to vector<1x256xf32>
    %16 = vector.broadcast %15 : vector<1x256xf32> to vector<8x256xf32>
    %17 = arith.addf %13, %16 : vector<8x256xf32>
    %18 = arith.negf %17 : vector<8x256xf32>
    %19 = math.exp %18 : vector<8x256xf32>
    %cst_10 = arith.constant 1.000000e+00 : f32
    %20 = vector.broadcast %cst_10 : f32 to vector<8x256xf32>
    %21 = arith.addf %20, %19 : vector<8x256xf32>
    %22 = arith.divf %20, %21 : vector<8x256xf32>
    %23 = arith.mulf %17, %22 : vector<8x256xf32>
    %24 = arith.truncf %23 : vector<8x256xf32> to vector<8x256xbf16>
    %c0_11 = arith.constant 0 : index
    %c0_12 = arith.constant 0 : index
    %25 = vector.load %arg6[%c0_11, %c0_12] : memref<256x128xbf16, #tpu.memory_space<vmem>>, vector<256x128xbf16>
    %cst_13 = arith.constant dense<0.000000e+00> : vector<8x128xf32>
    %26 = tpu.matmul %24, %25, %cst_13 {dimension_numbers = #tpu.dot_dimension_numbers<[1], [0], [0], [1], [0, 0, 1, 1], [], []>} : vector<8x256xbf16>, vector<256x128xbf16>, vector<8x128xf32> -> vector<8x128xf32>
    %c0_14 = arith.constant 0 : index
    %c0_15 = arith.constant 0 : index
    %27 = vector.load %arg7[%c0_14, %c0_15] : memref<1x128xbf16, #tpu.memory_space<vmem>>, vector<1x128xbf16>
    %28 = arith.extf %27 : vector<1x128xbf16> to vector<1x128xf32>
    %29 = vector.broadcast %28 : vector<1x128xf32> to vector<8x128xf32>
    %30 = arith.addf %26, %29 : vector<8x128xf32>
    %c0_16 = arith.constant 0 : index
    %c0_17 = arith.constant 0 : index
    %31 = vector.load %arg8[%c0_16, %c0_17] : memref<8x128xf32, #tpu.memory_space<vmem>>, vector<8x128xf32>
    tpu.vector_store %arg8[%c0_16, %c0_17], %30 {strides = array<i32>} : memref<8x128xf32, #tpu.memory_space<vmem>>, vector<8x128xf32>,
    return
  }
  func.func @transform_0(%arg0: i32) -> (i32, i32) {
    %c0_i32 = arith.constant 0 : i32
    %c0_i32_0 = arith.constant 0 : i32
    %c0_i32_1 = arith.constant 0 : i32
    return %c0_i32, %c0_i32_0 : i32, i32
  }
  func.func @transform_1(%arg0: i32) -> (i32, i32) {
    %c0_i32 = arith.constant 0 : i32
    %c0_i32_0 = arith.constant 0 : i32
    %c0_i32_1 = arith.constant 0 : i32
    return %c0_i32, %c0_i32_0 : i32, i32
  }
  func.func @transform_2(%arg0: i32) -> (i32, i32) {
    %c0_i32 = arith.constant 0 : i32
    %c0_i32_0 = arith.constant 0 : i32
    %c0_i32_1 = arith.constant 0 : i32
    return %c0_i32, %c0_i32_0 : i32, i32
  }
  func.func @transform_3(%arg0: i32) -> (i32, i32) {
    %c0_i32 = arith.constant 0 : i32
    %c0_i32_0 = arith.constant 0 : i32
    %c0_i32_1 = arith.constant 0 : i32
    return %c0_i32, %c0_i32_0 : i32, i32
  }
  func.func @transform_4(%arg0: i32) -> (i32, i32) {
    %c0_i32 = arith.constant 0 : i32
    %c0_i32_0 = arith.constant 0 : i32
    %c0_i32_1 = arith.constant 0 : i32
    return %c0_i32, %c0_i32_0 : i32, i32
  }
  func.func @transform_5(%arg0: i32) -> (i32, i32) {
    %c0_i32 = arith.constant 0 : i32
    %c0_i32_0 = arith.constant 0 : i32
    return %c0_i32, %arg0 : i32, i32
  }
  func.func @transform_6(%arg0: i32) -> (i32, i32) {
    %c0_i32 = arith.constant 0 : i32
    %c0_i32_0 = arith.constant 0 : i32
    return %c0_i32, %arg0 : i32, i32
  }
  func.func @transform_7(%arg0: i32) -> (i32, i32) {
    %c0_i32 = arith.constant 0 : i32
    %c0_i32_0 = arith.constant 0 : i32
    return %c0_i32, %arg0 : i32, i32
  }
}

</mosaic_0001>

<llo_original>
// kernel: timestep_embedder.1
$region0: #{timestep_embedder.1}
  #allocation0 [shape = 'u32[]', space=smem, size = 0x4, offset = 0x4, fixed_abs, tag = 'smem constant byte address 0x4 - core index']
  #allocation1 [shape = 'u32[144,128]{1,0:T(1,128)}', space=vmem, size = 0x12000, scoped, tag = 'internal scratch']
  %s0 = inlined_call_operand.vmem [shape: f32[8,1], index: 0, kind: input, shape index: {}]
  %s1 = inlined_call_operand.vmem [shape: f32[1,128], index: 1, kind: input, shape index: {}]
  %s2 = inlined_call_operand.vmem [shape: bf16[128,256], index: 2, kind: input, shape index: {}]
  %s3 = inlined_call_operand.vmem [shape: bf16[128,256], index: 3, kind: input, shape index: {}]
  %s4 = inlined_call_operand.vmem [shape: bf16[1,256], index: 4, kind: input, shape index: {}]
  %s5 = inlined_call_operand.vmem [shape: bf16[256,256], index: 5, kind: input, shape index: {}]
  %s6 = inlined_call_operand.vmem [shape: bf16[1,256], index: 6, kind: input, shape index: {}]
  %s7 = inlined_call_operand.hbm [shape: f32[8,256], index: 7, kind: output, shape index: {}]
  %s8 = sld [smem:[#allocation0]]
  $region102: #{timestep_embedder.1} parent=0
    _
  %s10 = ssub.s32 1, %s8
  %s11 = scalar_select 0, %s10, %s8
  $region1: #{timestep_embedder.1} parent=0
    #allocation2 [shape = 'u8[131072]{0}', space=vmem, size = 0x20000, scoped, tag = 'input window, operand 5']
    #allocation3 [shape = 'u8[8192]{0}', space=vmem, size = 0x2000, scoped, tag = 'output window, operand 0']
    #allocation4 [shape = 's32[2]{0}', space=sflag, size = 0x8, scoped, tag = 'scoped memory for timestep_embedder.1']
    %12 = vsyncpa [#allocation4], 0
    %s13 = scalar_lea.sflag [#allocation4], 1
    %14 = vsyncpa %s13, 0
    loop: start=0, step=1, limit=4
    $region2: #{timestep_embedder.1} parent=1 // loop_pre_header
      _
    $region3: #{timestep_embedder.1} parent=1 // loop_header
      %s16 = sphi 0, %s20
      %p17 = scmp.ge.s32.totalorder %s16, 4
      %s24 = sphi 0, %s24
      %s26 = sphi 0, %s24
      %s27 = sphi 0, %s26
      %s41 = sphi 0, %s27
      %s45 = sphi 0, %s45
      %s47 = sphi 0, %s45
      %s48 = sphi 0, %s47
      %s62 = sphi 0, %s48
      %s66 = sphi 0, %s66
      %s68 = sphi 0, %s66
      %s69 = sphi 0, %s68
      %s83 = sphi 0, %s69
      %s87 = sphi 0, %s87
      %s89 = sphi 0, %s87
      %s90 = sphi 0, %s89
      %s104 = sphi 0, %s90
      %s108 = sphi 0, %s108
      %s110 = sphi 0, %s108
      %s111 = sphi 0, %s110
      %s125 = sphi 0, %s111
      %s131 = sphi 0, %s133
      %s134 = sphi 0, %s131
      %s135 = sphi 0, %s134
      %s151 = sphi 0, %s135
      %s157 = sphi 0, %s159
      %s160 = sphi 0, %s157
      %s161 = sphi 0, %s160
      %s177 = sphi 0, %s161
      %s183 = sphi 0, %s185
      %s186 = sphi 0, %s183
      %s187 = sphi 0, %s186
      %s203 = sphi 0, %s187
    $region4: #{timestep_embedder.1} parent=1 // loop_header_branch
      %19 = sbr.rel (%p17) target = $region8
    $region5: #{timestep_embedder.1} parent=1 // loop_body
      %s21 = ssub.s32 %s16, 1
      %s22 = ssub.s32 %s16, 2
      %s23 = sadd.s32 %s16, 1
      %s25 = sadd.s32 %s24, 1
      %p28 = scmp.eq.s32.totalorder %s16, 1
      %p29 = scmp.ne.s32.totalorder %s24, %s26
      %p30 = scmp.eq.s32.totalorder %s16, 0
      %p31 = por %p29, %p30
      %p32 = scmp.ne.s32.totalorder %s24, %s26
      %p33 = scmp.eq.s32.totalorder %s21, 1
      %p34 = por %p32, %p33
      %p35 = scmp.ne.s32.totalorder %s26, %s27
      %p36 = scmp.eq.s32.totalorder %s21, 0
      %p37 = por %p35, %p36
      %p38 = scmp.ne.s32.totalorder %s26, %s27
      %p39 = scmp.eq.s32.totalorder %s22, 1
      %p40 = por %p38, %p39
      %p42 = scmp.ne.s32.totalorder %s27, %s41
      %p43 = scmp.eq.s32.totalorder %s22, 0
      %p44 = por %p42, %p43
      %s46 = sadd.s32 %s45, 1
      %p49 = scmp.eq.s32.totalorder %s16, 1
      %p50 = scmp.ne.s32.totalorder %s45, %s47
      %p51 = scmp.eq.s32.totalorder %s16, 0
      %p52 = por %p50, %p51
      %p53 = scmp.ne.s32.totalorder %s45, %s47
      %p54 = scmp.eq.s32.totalorder %s21, 1
      %p55 = por %p53, %p54
      %p56 = scmp.ne.s32.totalorder %s47, %s48
      %p57 = scmp.eq.s32.totalorder %s21, 0
      %p58 = por %p56, %p57
      %p59 = scmp.ne.s32.totalorder %s47, %s48
      %p60 = scmp.eq.s32.totalorder %s22, 1
      %p61 = por %p59, %p60
      %p63 = scmp.ne.s32.totalorder %s48, %s62
      %p64 = scmp.eq.s32.totalorder %s22, 0
      %p65 = por %p63, %p64
      %s67 = sadd.s32 %s66, 1
      %p70 = scmp.eq.s32.totalorder %s16, 1
      %p71 = scmp.ne.s32.totalorder %s66, %s68
      %p72 = scmp.eq.s32.totalorder %s16, 0
      %p73 = por %p71, %p72
      %p74 = scmp.ne.s32.totalorder %s66, %s68
      %p75 = scmp.eq.s32.totalorder %s21, 1
      %p76 = por %p74, %p75
      %p77 = scmp.ne.s32.totalorder %s68, %s69
      %p78 = scmp.eq.s32.totalorder %s21, 0
      %p79 = por %p77, %p78
      %p80 = scmp.ne.s32.totalorder %s68, %s69
      %p81 = scmp.eq.s32.totalorder %s22, 1
      %p82 = por %p80, %p81
      %p84 = scmp.ne.s32.totalorder %s69, %s83
      %p85 = scmp.eq.s32.totalorder %s22, 0
      %p86 = por %p84, %p85
      %s88 = sadd.s32 %s87, 1
      %p91 = scmp.eq.s32.totalorder %s16, 1
      %p92 = scmp.ne.s32.totalorder %s87, %s89
      %p93 = scmp.eq.s32.totalorder %s16, 0
      %p94 = por %p92, %p93
      %p95 = scmp.ne.s32.totalorder %s87, %s89
      %p96 = scmp.eq.s32.totalorder %s21, 1
      %p97 = por %p95, %p96
      %p98 = scmp.ne.s32.totalorder %s89, %s90
      %p99 = scmp.eq.s32.totalorder %s21, 0
      %p100 = por %p98, %p99
      %p101 = scmp.ne.s32.totalorder %s89, %s90
      %p102 = scmp.eq.s32.totalorder %s22, 1
      %p103 = por %p101, %p102
      %p105 = scmp.ne.s32.totalorder %s90, %s104
      %p106 = scmp.eq.s32.totalorder %s22, 0
      %p107 = por %p105, %p106
      %s109 = sadd.s32 %s108, 1
      %p112 = scmp.eq.s32.totalorder %s16, 1
      %p113 = scmp.ne.s32.totalorder %s108, %s110
      %p114 = scmp.eq.s32.totalorder %s16, 0
      %p115 = por %p113, %p114
      %p116 = scmp.ne.s32.totalorder %s108, %s110
      %p117 = scmp.eq.s32.totalorder %s21, 1
      %p118 = por %p116, %p117
      %p119 = scmp.ne.s32.totalorder %s110, %s111
      %p120 = scmp.eq.s32.totalorder %s21, 0
      %p121 = por %p119, %p120
      %p122 = scmp.ne.s32.totalorder %s110, %s111
      %p123 = scmp.eq.s32.totalorder %s22, 1
      %p124 = por %p122, %p123
      %p126 = scmp.ne.s32.totalorder %s111, %s125
      %p127 = scmp.eq.s32.totalorder %s22, 0
      %p128 = por %p126, %p127
      %s129 = ssub.s32 %s16, %s23
      %p130 = scmp.eq.s32.totalorder %s129, 0
      %s132 = sadd.s32 %s131, 1
      %s133 = scalar_select %p130, %s131, %s132
      %p136 = pneg %p130
      %p137 = scmp.eq.s32.totalorder %s16, 1
      %p138 = por %p136, %p137
      %p139 = scmp.ne.s32.totalorder %s131, %s134
      %p140 = scmp.eq.s32.totalorder %s16, 0
      %p141 = por %p139, %p140
      %p142 = scmp.ne.s32.totalorder %s131, %s134
      %p143 = scmp.eq.s32.totalorder %s21, 1
      %p144 = por %p142, %p143
      %p145 = scmp.ne.s32.totalorder %s134, %s135
      %p146 = scmp.eq.s32.totalorder %s21, 0
      %p147 = por %p145, %p146
      %p148 = scmp.ne.s32.totalorder %s134, %s135
      %p149 = scmp.eq.s32.totalorder %s22, 1
      %p150 = por %p148, %p149
      %p152 = scmp.ne.s32.totalorder %s135, %s151
      %p153 = scmp.eq.s32.totalorder %s22, 0
      %p154 = por %p152, %p153
      %s155 = ssub.s32 %s16, %s23
      %p156 = scmp.eq.s32.totalorder %s155, 0
      %s158 = sadd.s32 %s157, 1
      %s159 = scalar_select %p156, %s157, %s158
      %p162 = pneg %p156
      %p163 = scmp.eq.s32.totalorder %s16, 1
      %p164 = por %p162, %p163
      %p165 = scmp.ne.s32.totalorder %s157, %s160
      %p166 = scmp.eq.s32.totalorder %s16, 0
      %p167 = por %p165, %p166
      %p168 = scmp.ne.s32.totalorder %s157, %s160
      %p169 = scmp.eq.s32.totalorder %s21, 1
      %p170 = por %p168, %p169
      %p171 = scmp.ne.s32.totalorder %s160, %s161
      %p172 = scmp.eq.s32.totalorder %s21, 0
      %p173 = por %p171, %p172
      %p174 = scmp.ne.s32.totalorder %s160, %s161
      %p175 = scmp.eq.s32.totalorder %s22, 1
      %p176 = por %p174, %p175
      %p178 = scmp.ne.s32.totalorder %s161, %s177
      %p179 = scmp.eq.s32.totalorder %s22, 0
      %p180 = por %p178, %p179
      %s181 = ssub.s32 %s16, %s23
      %p182 = scmp.eq.s32.totalorder %s181, 0
      %s184 = sadd.s32 %s183, 1
      %s185 = scalar_select %p182, %s183, %s184
      %p188 = pneg %p182
      %p189 = scmp.eq.s32.totalorder %s16, 1
      %p190 = por %p188, %p189
      %p191 = scmp.ne.s32.totalorder %s183, %s186
      %p192 = scmp.eq.s32.totalorder %s16, 0
      %p193 = por %p191, %p192
      %p194 = scmp.ne.s32.totalorder %s183, %s186
      %p195 = scmp.eq.s32.totalorder %s21, 1
      %p196 = por %p194, %p195
      %p197 = scmp.ne.s32.totalorder %s186, %s187
      %p198 = scmp.eq.s32.totalorder %s21, 0
      %p199 = por %p197, %p198
      %p200 = scmp.ne.s32.totalorder %s186, %s187
      %p201 = scmp.eq.s32.totalorder %s22, 1
      %p202 = por %p200, %p201
      %p204 = scmp.ne.s32.totalorder %s187, %s203
      %p205 = scmp.eq.s32.totalorder %s22, 0
      %p206 = por %p204, %p205
      %p207 = scmp.le.s32.totalorder 1, %s16
      %p208 = scmp.lt.s32.totalorder %s16, 3
      %p209 = pnand %p207, %p208
      %p210 = pneg %p209
      // Predicated region
      $region9: #{timestep_embedder.1} parent=5 // pred_check
        _
      $region10: #{timestep_embedder.1} parent=5 // pred_check_branch
        %212 = sbr.rel (%p209) target = $region12
      $region11: #{timestep_embedder.1} parent=5 // pred_region
        %s213 = ssub.s32 %s16, 1
        // Predicated region
        $region13: #{timestep_embedder.1} parent=11 // pred_check
          %p214 = pneg %p37
        $region14: #{timestep_embedder.1} parent=11 // pred_check_branch
          %216 = sbr.rel (%p214) target = $region16
        $region15: #{timestep_embedder.1} parent=11 // pred_region
          _
        $region16: #{timestep_embedder.1} parent=11 // pred_fallthru
          _
        // Predicated region
        $region17: #{timestep_embedder.1} parent=11 // pred_check
          %p217 = pneg %p58
        $region18: #{timestep_embedder.1} parent=11 // pred_check_branch
          %219 = sbr.rel (%p217) target = $region20
        $region19: #{timestep_embedder.1} parent=11 // pred_region
          _
        $region20: #{timestep_embedder.1} parent=11 // pred_fallthru
          _
        // Predicated region
        $region21: #{timestep_embedder.1} parent=11 // pred_check
          %p220 = pneg %p79
        $region22: #{timestep_embedder.1} parent=11 // pred_check_branch
          %222 = sbr.rel (%p220) target = $region24
        $region23: #{timestep_embedder.1} parent=11 // pred_region
          _
        $region24: #{timestep_embedder.1} parent=11 // pred_fallthru
          _
        // Predicated region
        $region25: #{timestep_embedder.1} parent=11 // pred_check
          %p223 = pneg %p100
        $region26: #{timestep_embedder.1} parent=11 // pred_check_branch
          %225 = sbr.rel (%p223) target = $region28
        $region27: #{timestep_embedder.1} parent=11 // pred_region
          _
        $region28: #{timestep_embedder.1} parent=11 // pred_fallthru
          _
        // Predicated region
        $region29: #{timestep_embedder.1} parent=11 // pred_check
          %p226 = pneg %p121
        $region30: #{timestep_embedder.1} parent=11 // pred_check_branch
          %228 = sbr.rel (%p226) target = $region32
        $region31: #{timestep_embedder.1} parent=11 // pred_region
          _
        $region32: #{timestep_embedder.1} parent=11 // pred_fallthru
          _
      $region12: #{timestep_embedder.1} parent=5 // pred_fallthru
        _
      %p229 = scmp.lt.s32.totalorder %s16, 2
      // Predicated region
      $region33: #{timestep_embedder.1} parent=5 // pred_check
        %p230 = pneg %p229
      $region34: #{timestep_embedder.1} parent=5 // pred_check_branch
        %232 = sbr.rel (%p230) target = $region36
      $region35: #{timestep_embedder.1} parent=5 // pred_region
        // Predicated region
        $region37: #{timestep_embedder.1} parent=35 // pred_check
          %p233 = pneg %p141
        $region38: #{timestep_embedder.1} parent=35 // pred_check_branch
          %235 = sbr.rel (%p233) target = $region40
        $region39: #{timestep_embedder.1} parent=35 // pred_region
          %s236 = sand.u32 %s131, 1
          %s237 = sand.u32 %s131, 1
          %s238 = smul.addr %s237, 128
          %s239 = scalar_lea.vmem [#allocation2], %s238
          %s240 = smul.addr %s16, 4
          %s241 = scalar_lea.vmem %s5, %s240
          // Predicated region
          $region41: #{timestep_embedder.1} parent=39 // pred_check
            _
          $region42: #{timestep_embedder.1} parent=39 // pred_check_branch
            %243 = sbr.rel (0) target = $region44
          $region43: #{timestep_embedder.1} parent=39 // pred_region
            // Predicated region
            $region45: #{timestep_embedder.1} parent=43 // pred_check
              _
            $region46: #{timestep_embedder.1} parent=43 // pred_check_branch
              %245 = sbr.rel target = $region48
            $region47: #{timestep_embedder.1} parent=43 // pred_region
              // Predicated region
              $region60: #{timestep_embedder.1} parent=47 // pred_check
                _
              $region61: #{timestep_embedder.1} parent=47 // pred_check_branch
                %323 = sbr.rel (0) target = $region63
              $region62: #{timestep_embedder.1} parent=47 // pred_region
                loop: start=0, step=1, limit=1
                $region64: #{timestep_embedder.1} parent=62 // loop_pre_header
                  _
                $region65: #{timestep_embedder.1} parent=62 // loop_header
                  %s325 = sphi 0, %s329
                  %p326 = scmp.ge.s32.totalorder %s325, 1
                  %s330 = sphi %s241, %s241
                  %s331 = sphi %s239, %s239
                $region66: #{timestep_embedder.1} parent=62 // loop_header_branch
                  %328 = sbr.rel (%p326) target = $region70
                $region67: #{timestep_embedder.1} parent=62 // loop_body
                  _
                $region68: #{timestep_embedder.1} parent=62 // loop_footer
                  %s329 = sadd.s32 1, %s325
                $region69: #{timestep_embedder.1} parent=62 // loop_footer_branch
                  %324 = sbr.rel target = $region65
                $region70: #{timestep_embedder.1} parent=62 // loop_exit
                  _
                %s333 = ssub.s32 16, 1
                loop: start=0, step=1, limit=1
                $region71: #{timestep_embedder.1} parent=62 // loop_pre_header
                  _
                $region72: #{timestep_embedder.1} parent=62 // loop_header
                  %s335 = sphi 0, %s339
                  %p336 = scmp.ge.s32.totalorder %s335, 1
                  %s340 = sphi %s241, %s241
                  %s341 = sphi %s239, %s239
                $region73: #{timestep_embedder.1} parent=62 // loop_header_branch
                  %338 = sbr.rel (%p336) target = $region77
                $region74: #{timestep_embedder.1} parent=62 // loop_body
                  %v342 = vld [vmem:[%s340] sm:%s333]
                  %343 = vst [vmem:[%s341] sm:%s333] %v342
                  %v344 = vld [vmem:[%s340 + $0x8] sm:%s333]
                  %345 = vst [vmem:[%s341 + $0x4] sm:%s333] %v344
                  %v346 = vld [vmem:[%s340 + $0x10] sm:%s333]
                  %347 = vst [vmem:[%s341 + $0x8] sm:%s333] %v346
                  %v348 = vld [vmem:[%s340 + $0x18] sm:%s333]
                  %349 = vst [vmem:[%s341 + $0xc] sm:%s333] %v348
                  %v350 = vld [vmem:[%s340 + $0x20] sm:%s333]
                  %351 = vst [vmem:[%s341 + $0x10] sm:%s333] %v350
                  %v352 = vld [vmem:[%s340 + $0x28] sm:%s333]
                  %353 = vst [vmem:[%s341 + $0x14] sm:%s333] %v352
                  %v354 = vld [vmem:[%s340 + $0x30] sm:%s333]
                  %355 = vst [vmem:[%s341 + $0x18] sm:%s333] %v354
                  %v356 = vld [vmem:[%s340 + $0x38] sm:%s333]
                  %357 = vst [vmem:[%s341 + $0x1c] sm:%s333] %v356
                  %v358 = vld [vmem:[%s340 + $0x40] sm:%s333]
                  %359 = vst [vmem:[%s341 + $0x20] sm:%s333] %v358
                  %v360 = vld [vmem:[%s340 + $0x48] sm:%s333]
                  %361 = vst [vmem:[%s341 + $0x24] sm:%s333] %v360
                  %v362 = vld [vmem:[%s340 + $0x50] sm:%s333]
                  %363 = vst [vmem:[%s341 + $0x28] sm:%s333] %v362
                  %v364 = vld [vmem:[%s340 + $0x58] sm:%s333]
                  %365 = vst [vmem:[%s341 + $0x2c] sm:%s333] %v364
                  %v366 = vld [vmem:[%s340 + $0x60] sm:%s333]
                  %367 = vst [vmem:[%s341 + $0x30] sm:%s333] %v366
                  %v368 = vld [vmem:[%s340 + $0x68] sm:%s333]
                  %369 = vst [vmem:[%s341 + $0x34] sm:%s333] %v368
                  %v370 = vld [vmem:[%s340 + $0x70] sm:%s333]
                  %371 = vst [vmem:[%s341 + $0x38] sm:%s333] %v370
                  %v372 = vld [vmem:[%s340 + $0x78] sm:%s333]
                  %373 = vst [vmem:[%s341 + $0x3c] sm:%s333] %v372
                  %v374 = vld [vmem:[%s340 + $0x80] sm:%s333]
                  %375 = vst [vmem:[%s341 + $0x40] sm:%s333] %v374
                  %v376 = vld [vmem:[%s340 + $0x88] sm:%s333]
                  %377 = vst [vmem:[%s341 + $0x44] sm:%s333] %v376
                  %v378 = vld [vmem:[%s340 + $0x90] sm:%s333]
                  %379 = vst [vmem:[%s341 + $0x48] sm:%s333] %v378
                  %v380 = vld [vmem:[%s340 + $0x98] sm:%s333]
                  %381 = vst [vmem:[%s341 + $0x4c] sm:%s333] %v380
                  %v382 = vld [vmem:[%s340 + $0xa0] sm:%s333]
                  %383 = vst [vmem:[%s341 + $0x50] sm:%s333] %v382
                  %v384 = vld [vmem:[%s340 + $0xa8] sm:%s333]
                  %385 = vst [vmem:[%s341 + $0x54] sm:%s333] %v384
                  %v386 = vld [vmem:[%s340 + $0xb0] sm:%s333]
                  %387 = vst [vmem:[%s341 + $0x58] sm:%s333] %v386
                  %v388 = vld [vmem:[%s340 + $0xb8] sm:%s333]
                  %389 = vst [vmem:[%s341 + $0x5c] sm:%s333] %v388
                  %v390 = vld [vmem:[%s340 + $0xc0] sm:%s333]
                  %391 = vst [vmem:[%s341 + $0x60] sm:%s333] %v390
                  %v392 = vld [vmem:[%s340 + $0xc8] sm:%s333]
                  %393 = vst [vmem:[%s341 + $0x64] sm:%s333] %v392
                  %v394 = vld [vmem:[%s340 + $0xd0] sm:%s333]
                  %395 = vst [vmem:[%s341 + $0x68] sm:%s333] %v394
                  %v396 = vld [vmem:[%s340 + $0xd8] sm:%s333]
                  %397 = vst [vmem:[%s341 + $0x6c] sm:%s333] %v396
                  %v398 = vld [vmem:[%s340 + $0xe0] sm:%s333]
                  %399 = vst [vmem:[%s341 + $0x70] sm:%s333] %v398
                  %v400 = vld [vmem:[%s340 + $0xe8] sm:%s333]
                  %401 = vst [vmem:[%s341 + $0x74] sm:%s333] %v400
                  %v402 = vld [vmem:[%s340 + $0xf0] sm:%s333]
                  %403 = vst [vmem:[%s341 + $0x78] sm:%s333] %v402
                  %v404 = vld [vmem:[%s340 + $0xf8] sm:%s333]
                  %405 = vst [vmem:[%s341 + $0x7c] sm:%s333] %v404
                $region75: #{timestep_embedder.1} parent=62 // loop_footer
                  %s339 = sadd.s32 1, %s335
                $region76: #{timestep_embedder.1} parent=62 // loop_footer_branch
                  %334 = sbr.rel target = $region72
                $region77: #{timestep_embedder.1} parent=62 // loop_exit
                  _
              $region63: #{timestep_embedder.1} parent=47 // pred_fallthru
                _
            $region48: #{timestep_embedder.1} parent=43 // pred_fallthru
              _
            // Predicated region
            $region49: #{timestep_embedder.1} parent=43 // pred_check
              _
            $region50: #{timestep_embedder.1} parent=43 // pred_check_branch
              %247 = sbr.rel (0) target = $region52
            $region51: #{timestep_embedder.1} parent=43 // pred_region
              %s249 = ssub.s32 16, 1
              loop: start=0, step=1, limit=1
              $region53: #{timestep_embedder.1} parent=51 // loop_pre_header
                _
              $region54: #{timestep_embedder.1} parent=51 // loop_header
                %s251 = sphi 0, %s255
                %p252 = scmp.ge.s32.totalorder %s251, 1
                %s256 = sphi %s241, %s241
                %s257 = sphi %s239, %s239
              $region55: #{timestep_embedder.1} parent=51 // loop_header_branch
                %254 = sbr.rel (%p252) target = $region59
              $region56: #{timestep_embedder.1} parent=51 // loop_body
                %v258 = vld [vmem:[%s256] sm:%s249]
                %259 = vst [vmem:[%s257] sm:%s249] %v258
                %v260 = vld [vmem:[%s256 + $0x8] sm:%s249]
                %261 = vst [vmem:[%s257 + $0x4] sm:%s249] %v260
                %v262 = vld [vmem:[%s256 + $0x10] sm:%s249]
                %263 = vst [vmem:[%s257 + $0x8] sm:%s249] %v262
                %v264 = vld [vmem:[%s256 + $0x18] sm:%s249]
                %265 = vst [vmem:[%s257 + $0xc] sm:%s249] %v264
                %v266 = vld [vmem:[%s256 + $0x20] sm:%s249]
                %267 = vst [vmem:[%s257 + $0x10] sm:%s249] %v266
                %v268 = vld [vmem:[%s256 + $0x28] sm:%s249]
                %269 = vst [vmem:[%s257 + $0x14] sm:%s249] %v268
                %v270 = vld [vmem:[%s256 + $0x30] sm:%s249]
                %271 = vst [vmem:[%s257 + $0x18] sm:%s249] %v270
                %v272 = vld [vmem:[%s256 + $0x38] sm:%s249]
                %273 = vst [vmem:[%s257 + $0x1c] sm:%s249] %v272
                %v274 = vld [vmem:[%s256 + $0x40] sm:%s249]
                %275 = vst [vmem:[%s257 + $0x20] sm:%s249] %v274
                %v276 = vld [vmem:[%s256 + $0x48] sm:%s249]
                %277 = vst [vmem:[%s257 + $0x24] sm:%s249] %v276
                %v278 = vld [vmem:[%s256 + $0x50] sm:%s249]
                %279 = vst [vmem:[%s257 + $0x28] sm:%s249] %v278
                %v280 = vld [vmem:[%s256 + $0x58] sm:%s249]
                %281 = vst [vmem:[%s257 + $0x2c] sm:%s249] %v280
                %v282 = vld [vmem:[%s256 + $0x60] sm:%s249]
                %283 = vst [vmem:[%s257 + $0x30] sm:%s249] %v282
                %v284 = vld [vmem:[%s256 + $0x68] sm:%s249]
                %285 = vst [vmem:[%s257 + $0x34] sm:%s249] %v284
                %v286 = vld [vmem:[%s256 + $0x70] sm:%s249]
                %287 = vst [vmem:[%s257 + $0x38] sm:%s249] %v286
                %v288 = vld [vmem:[%s256 + $0x78] sm:%s249]
                %289 = vst [vmem:[%s257 + $0x3c] sm:%s249] %v288
                %v290 = vld [vmem:[%s256 + $0x80] sm:%s249]
                %291 = vst [vmem:[%s257 + $0x40] sm:%s249] %v290
                %v292 = vld [vmem:[%s256 + $0x88] sm:%s249]
                %293 = vst [vmem:[%s257 + $0x44] sm:%s249] %v292
                %v294 = vld [vmem:[%s256 + $0x90] sm:%s249]
                %295 = vst [vmem:[%s257 + $0x48] sm:%s249] %v294
                %v296 = vld [vmem:[%s256 + $0x98] sm:%s249]
                %297 = vst [vmem:[%s257 + $0x4c] sm:%s249] %v296
                %v298 = vld [vmem:[%s256 + $0xa0] sm:%s249]
                %299 = vst [vmem:[%s257 + $0x50] sm:%s249] %v298
                %v300 = vld [vmem:[%s256 + $0xa8] sm:%s249]
                %301 = vst [vmem:[%s257 + $0x54] sm:%s249] %v300
                %v302 = vld [vmem:[%s256 + $0xb0] sm:%s249]
                %303 = vst [vmem:[%s257 + $0x58] sm:%s249] %v302
                %v304 = vld [vmem:[%s256 + $0xb8] sm:%s249]
                %305 = vst [vmem:[%s257 + $0x5c] sm:%s249] %v304
                %v306 = vld [vmem:[%s256 + $0xc0] sm:%s249]
                %307 = vst [vmem:[%s257 + $0x60] sm:%s249] %v306
                %v308 = vld [vmem:[%s256 + $0xc8] sm:%s249]
                %309 = vst [vmem:[%s257 + $0x64] sm:%s249] %v308
                %v310 = vld [vmem:[%s256 + $0xd0] sm:%s249]
                %311 = vst [vmem:[%s257 + $0x68] sm:%s249] %v310
                %v312 = vld [vmem:[%s256 + $0xd8] sm:%s249]
                %313 = vst [vmem:[%s257 + $0x6c] sm:%s249] %v312
                %v314 = vld [vmem:[%s256 + $0xe0] sm:%s249]
                %315 = vst [vmem:[%s257 + $0x70] sm:%s249] %v314
                %v316 = vld [vmem:[%s256 + $0xe8] sm:%s249]
                %317 = vst [vmem:[%s257 + $0x74] sm:%s249] %v316
                %v318 = vld [vmem:[%s256 + $0xf0] sm:%s249]
                %319 = vst [vmem:[%s257 + $0x78] sm:%s249] %v318
                %v320 = vld [vmem:[%s256 + $0xf8] sm:%s249]
                %321 = vst [vmem:[%s257 + $0x7c] sm:%s249] %v320
              $region57: #{timestep_embedder.1} parent=51 // loop_footer
                %s255 = sadd.s32 1, %s251
              $region58: #{timestep_embedder.1} parent=51 // loop_footer_branch
                %250 = sbr.rel target = $region54
              $region59: #{timestep_embedder.1} parent=51 // loop_exit
                _
            $region52: #{timestep_embedder.1} parent=43 // pred_fallthru
              _
          $region44: #{timestep_embedder.1} parent=39 // pred_fallthru
            _
          %406 = vnop
        $region40: #{timestep_embedder.1} parent=35 // pred_fallthru
          _
        // Predicated region
        $region78: #{timestep_embedder.1} parent=35 // pred_check
          %p407 = pneg %p167
        $region79: #{timestep_embedder.1} parent=35 // pred_check_branch
          %409 = sbr.rel (%p407) target = $region81
        $region80: #{timestep_embedder.1} parent=35 // pred_region
          %p410 = scmp.lt.s32.totalorder %s16, 1
          %s411 = scalar_select %p410, %s16, 1
          %s412 = scalar_lea.vmem %s6, %s411
        $region81: #{timestep_embedder.1} parent=35 // pred_fallthru
          _
      $region36: #{timestep_embedder.1} parent=5 // pred_fallthru
        _
      %p413 = scmp.le.s32.totalorder 1, %s16
      %p414 = scmp.lt.s32.totalorder %s16, 3
      %p415 = pnand %p413, %p414
      %p416 = pneg %p415
      // Predicated region
      $region82: #{timestep_embedder.1} parent=5 // pred_check
        _
      $region83: #{timestep_embedder.1} parent=5 // pred_check_branch
        %418 = sbr.rel (%p415) target = $region85
      $region84: #{timestep_embedder.1} parent=5 // pred_region
        %s419 = ssub.s32 %s16, 1
        %s420 = sand.u32 %s134, 1
        %s421 = sand.u32 %s134, 1
        %s422 = smul.addr %s421, 128
        %s423 = scalar_lea.vmem [#allocation2], %s422
        // Predicated region
        $region86: #{timestep_embedder.1} parent=84 // pred_check
          %p424 = pneg %p147
        $region87: #{timestep_embedder.1} parent=84 // pred_check_branch
          %426 = sbr.rel (%p424) target = $region89
        $region88: #{timestep_embedder.1} parent=84 // pred_region
          _
        $region89: #{timestep_embedder.1} parent=84 // pred_fallthru
          _
        %p427 = pneg %p37
        %p428 = pneg %p34
        %p429 = pneg %p58
        %p430 = pneg %p55
        %p431 = pneg %p79
        %p432 = pneg %p76
        %p433 = pneg %p100
        %p434 = pneg %p97
        %p435 = pneg %p121
        %p436 = pneg %p118
        %s437 = sand.u32 %s134, 1
        %s438 = sand.u32 %s134, 1
        %s439 = smul.addr %s438, 128
        %s440 = scalar_lea.vmem [#allocation2], %s439
        %p441 = pneg %p147
        %p442 = pneg %p144
        %p443 = scmp.lt.s32.totalorder %s21, 1
        %s444 = scalar_select %p443, %s21, 1
        %s445 = scalar_lea.vmem %s6, %s444
        %p446 = pneg %p173
        %p447 = pneg %p170
        %p448 = pneg %p199
        %p449 = pneg %p196
        %s450 = sand.u32 %s186, 1
        %s451 = scalar_lea.sflag [#allocation4], %s450
        %s452 = sand.u32 %s186, 1
        %s453 = smul.addr %s452, 8
        %s454 = scalar_lea.vmem [#allocation3], %s453
        %p455 = scmp.lt.s32.totalorder %s21, 1
        %s456 = scalar_select %p455, %s21, 1
        %s457 = scalar_lea.vmem %s6, %s456
        %v459 = vld [vmem:[%s0] sm:$0xff]
        %v460 = vld [vmem:[%s1] sm:$0x1]
        %462 = vset.pattern.permute.xlu0 0
        %463 = vperm.xlu0 %462, %v459
        %v464 = vpop.permute.xlu0 %463
        %v467 = vlaneseq
        %v468 = vshrl.u32 %v467, 7
        %v469 = vsub.s32 0, %v468
        %v470 = vrot.slane %v460, %v469
        %v472 = vmul.f32 %v464, %v470
        %v473 = vand.u32 2147483647, %v472
        %vm474 = vcmp.le.f32.partialorder %v473, 0.7853982
        %vm475 = vcmp.lt.s32.totalorder %v472, 0
        %v476 = vand.u32 %v472, 2139095040
        %v477 = vshrl.u32 %v476, 23
        %v478 = vsub.s32 %v477, 127
        %v479 = vand.u32 2147483647, %v472
        %v480 = vand.u32 %v479, 8388607
        %v481 = vor.u32 %v480, 8388608
        %v482 = vsub.s32 0, %v481
        %v483 = vadd.s32 %v478, 1
        %vm484 = vcmp.gt.s32.totalorder %v483, 0
        %v485 = vsel %vm484, %v483, 0
        %v486 = vshrl.u32 %v485, 5
        %v487 = vand.u32 %v485, 31
        %v488 = vsub.s32 32, %v487
        %v489 = vshrl.u32 683565275, %v488
        %v490 = vshll.u32 683565275, %v487
        %v491 = vshrl.u32 2475754826, %v488
        %v492 = vor.u32 %v490, %v491
        %v493 = vshll.u32 2475754826, %v487
        %v494 = vshrl.u32 2131351028, %v488
        %v495 = vor.u32 %v493, %v494
        %v496 = vshll.u32 2131351028, %v487
        %v497 = vshrl.u32 2102212464, %v488
        %v498 = vor.u32 %v496, %v497
        %v499 = vshll.u32 2102212464, %v487
        %v500 = vshrl.u32 920167782, %v488
        %v501 = vor.u32 %v499, %v500
        %v502 = vshll.u32 920167782, %v487
        %v503 = vshrl.u32 1326507024, %v488
        %v504 = vor.u32 %v502, %v503
        %vm505 = vcmp.lt.s32.totalorder %v486, 1
        %vm506 = vcmp.lt.s32.totalorder %v486, 2
        %vm507 = vcmp.lt.s32.totalorder %v486, 3
        %vm508 = vcmp.lt.s32.totalorder %v486, 4
        %v509 = vsel %vm505, %v489, %v492
        %v510 = vsel %vm508, %v498, 2102212464
        %v511 = vsel %vm507, %v495, %v510
        %v512 = vsel %vm506, %v509, %v511
        %v513 = vsel %vm505, %v492, %v495
        %v514 = vsel %vm508, %v501, 920167782
        %v515 = vsel %vm507, %v498, %v514
        %v516 = vsel %vm506, %v513, %v515
        %v517 = vsel %vm505, %v495, %v498
        %v518 = vsel %vm508, %v504, 1326507024
        %v519 = vsel %vm507, %v501, %v518
        %v520 = vsel %vm506, %v517, %v519
        %v521 = vshll.u32 %v481, 8
        %v522 = vmul.u32.u64.compose %v521, %v520
        %v523 = vextract.low.u32 %v522
        %v524 = vextract.high.u32 %v522
        %v525 = vmul.u32.u64.compose %v521, %v516
        %v526 = vextract.low.u32 %v525
        %v527 = vextract.high.u32 %v525
        %v528 = vmul.u32 %v521, %v512
        %v529 = vadd.s32 %v524, %v526
        %vm530 = vc.u32 %v524, %v526
        %v531 = vadd.s32 %v527, 1
        %v532 = vsel %vm530, %v531, %v527
        %v533 = vadd.s32 %v528, %v532
        %v534 = vadd.s32 %v533, 536870912
        %v535 = vshrl.u32 %v534, 30
        %v536 = vshll.u32 %v535, 30
        %v537 = vsub.s32 %v533, %v536
        %vm538 = vcmp.lt.s32.totalorder %v537, 0
        %v539 = vsub.s32 0, %v537
        %v540 = vsel %vm538, %v539, %v537
        %v541 = vclz %v540
        %v542 = vsub.s32 %v541, 2
        %vm543 = vcmp.gt.s32.totalorder 0, %v542
        %v544 = vsel %vm543, 0, %v542
        %v545 = vsub.s32 32, %v544
        %v546 = vshll.u32 %v537, %v544
        %v547 = vshrl.u32 %v529, %v545
        %v548 = vor.u32 %v546, %v547
        %v549 = vsub.s32 4294967266, %v544
        %v550 = vadd.s32 %v549, 127
        %v551 = vshll.u32 %v550, 23
        %v552 = vor.u32 4788187, %v551
        %v553 = vand.u32 2147483647, %v552
        %v555 = vcvt.s32.f32 %v548
        %v556 = vmul.f32 %v555, %v553
        %v557 = vxor.u32 %v556, 2147483648
        %v558 = vsel %vm475, %v557, %v556
        %v559 = vsub.s32 4, %v535
        %v560 = vsel %vm475, %v559, %v535
        %v561 = vsel %vm474, %v472, %v558
        %v562 = vsel %vm474, 0, %v560
        %v563 = vcosq.f32.pop %v561
        %v564 = vsinq.f32.pop %v561
        %vm565 = vweird.f32 %v472
        %v566 = vand.u32 %v562, 3
        %vm567 = vcmp.lt.s32.totalorder %v566, 2
        %vm568 = vcmp.eq.s32.totalorder %v566, 0
        %v569 = vxor.u32 %v564, 2147483648
        %v570 = vsel %vm568, %v563, %v569
        %vm571 = vcmp.eq.s32.totalorder %v566, 2
        %v572 = vxor.u32 %v563, 2147483648
        %v573 = vsel %vm571, %v572, %v564
        %v574 = vsel %vm567, %v570, %v573
        %v575 = vsel %vm565, nan, %v574
        %v576 = vpack.c.bf16 %v575, %v575
        %v577 = vand.u32 2147483647, %v472
        %vm578 = vcmp.le.f32.partialorder %v577, 0.7853982
        %vm579 = vcmp.lt.s32.totalorder %v472, 0
        %v580 = vand.u32 %v472, 2139095040
        %v581 = vshrl.u32 %v580, 23
        %v582 = vsub.s32 %v581, 127
        %v583 = vand.u32 2147483647, %v472
        %v584 = vand.u32 %v583, 8388607
        %v585 = vor.u32 %v584, 8388608
        %v586 = vsub.s32 0, %v585
        %v587 = vadd.s32 %v582, 1
        %vm588 = vcmp.gt.s32.totalorder %v587, 0
        %v589 = vsel %vm588, %v587, 0
        %v590 = vshrl.u32 %v589, 5
        %v591 = vand.u32 %v589, 31
        %v592 = vsub.s32 32, %v591
        %v593 = vshrl.u32 683565275, %v592
        %v594 = vshll.u32 683565275, %v591
        %v595 = vshrl.u32 2475754826, %v592
        %v596 = vor.u32 %v594, %v595
        %v597 = vshll.u32 2475754826, %v591
        %v598 = vshrl.u32 2131351028, %v592
        %v599 = vor.u32 %v597, %v598
        %v600 = vshll.u32 2131351028, %v591
        %v601 = vshrl.u32 2102212464, %v592
        %v602 = vor.u32 %v600, %v601
        %v603 = vshll.u32 2102212464, %v591
        %v604 = vshrl.u32 920167782, %v592
        %v605 = vor.u32 %v603, %v604
        %v606 = vshll.u32 920167782, %v591
        %v607 = vshrl.u32 1326507024, %v592
        %v608 = vor.u32 %v606, %v607
        %vm609 = vcmp.lt.s32.totalorder %v590, 1
        %vm610 = vcmp.lt.s32.totalorder %v590, 2
        %vm611 = vcmp.lt.s32.totalorder %v590, 3
        %vm612 = vcmp.lt.s32.totalorder %v590, 4
        %v613 = vsel %vm609, %v593, %v596
        %v614 = vsel %vm612, %v602, 2102212464
        %v615 = vsel %vm611, %v599, %v614
        %v616 = vsel %vm610, %v613, %v615
        %v617 = vsel %vm609, %v596, %v599
        %v618 = vsel %vm612, %v605, 920167782
        %v619 = vsel %vm611, %v602, %v618
        %v620 = vsel %vm610, %v617, %v619
        %v621 = vsel %vm609, %v599, %v602
        %v622 = vsel %vm612, %v608, 1326507024
        %v623 = vsel %vm611, %v605, %v622
        %v624 = vsel %vm610, %v621, %v623
        %v625 = vshll.u32 %v585, 8
        %v626 = vmul.u32.u64.compose %v625, %v624
        %v627 = vextract.low.u32 %v626
        %v628 = vextract.high.u32 %v626
        %v629 = vmul.u32.u64.compose %v625, %v620
        %v630 = vextract.low.u32 %v629
        %v631 = vextract.high.u32 %v629
        %v632 = vmul.u32 %v625, %v616
        %v633 = vadd.s32 %v628, %v630
        %vm634 = vc.u32 %v628, %v630
        %v635 = vadd.s32 %v631, 1
        %v636 = vsel %vm634, %v635, %v631
        %v637 = vadd.s32 %v632, %v636
        %v638 = vadd.s32 %v637, 536870912
        %v639 = vshrl.u32 %v638, 30
        %v640 = vshll.u32 %v639, 30
        %v641 = vsub.s32 %v637, %v640
        %vm642 = vcmp.lt.s32.totalorder %v641, 0
        %v643 = vsub.s32 0, %v641
        %v644 = vsel %vm642, %v643, %v641
        %v645 = vclz %v644
        %v646 = vsub.s32 %v645, 2
        %vm647 = vcmp.gt.s32.totalorder 0, %v646
        %v648 = vsel %vm647, 0, %v646
        %v649 = vsub.s32 32, %v648
        %v650 = vshll.u32 %v641, %v648
        %v651 = vshrl.u32 %v633, %v649
        %v652 = vor.u32 %v650, %v651
        %v653 = vsub.s32 4294967266, %v648
        %v654 = vadd.s32 %v653, 127
        %v655 = vshll.u32 %v654, 23
        %v656 = vor.u32 4788187, %v655
        %v657 = vand.u32 2147483647, %v656
        %v659 = vcvt.s32.f32 %v652
        %v660 = vmul.f32 %v659, %v657
        %v661 = vxor.u32 %v660, 2147483648
        %v662 = vsel %vm579, %v661, %v660
        %v663 = vsub.s32 4, %v639
        %v664 = vsel %vm579, %v663, %v639
        %v665 = vsel %vm578, %v472, %v662
        %v666 = vsel %vm578, 0, %v664
        %v667 = vcosq.f32.pop %v665
        %v668 = vsinq.f32.pop %v665
        %vm669 = vweird.f32 %v472
        %v670 = vadd.s32 %v666, 3
        %v671 = vand.u32 %v670, 3
        %vm672 = vcmp.lt.s32.totalorder %v671, 2
        %vm673 = vcmp.eq.s32.totalorder %v671, 0
        %v674 = vxor.u32 %v668, 2147483648
        %v675 = vsel %vm673, %v667, %v674
        %vm676 = vcmp.eq.s32.totalorder %v671, 2
        %v677 = vxor.u32 %v667, 2147483648
        %v678 = vsel %vm676, %v677, %v668
        %v679 = vsel %vm672, %v675, %v678
        %v680 = vsel %vm669, nan, %v679
        %v681 = vpack.c.bf16 %v680, %v680
        %v682 = vld [vmem:[%s2] sm:$0xff]
        %v683 = vld [vmem:[%s2 + $0x8] sm:$0xff]
        %v684 = vld [vmem:[%s2 + $0x10] sm:$0xff]
        %v685 = vld [vmem:[%s2 + $0x18] sm:$0xff]
        %v686 = vld [vmem:[%s2 + $0x20] sm:$0xff]
        %v687 = vld [vmem:[%s2 + $0x28] sm:$0xff]
        %v688 = vld [vmem:[%s2 + $0x30] sm:$0xff]
        %v689 = vld [vmem:[%s2 + $0x38] sm:$0xff]
        %v690 = vld [vmem:[%s2 + $0x40] sm:$0xff]
        %v691 = vld [vmem:[%s2 + $0x48] sm:$0xff]
        %v692 = vld [vmem:[%s2 + $0x50] sm:$0xff]
        %v693 = vld [vmem:[%s2 + $0x58] sm:$0xff]
        %v694 = vld [vmem:[%s2 + $0x60] sm:$0xff]
        %v695 = vld [vmem:[%s2 + $0x68] sm:$0xff]
        %v696 = vld [vmem:[%s2 + $0x70] sm:$0xff]
        %v697 = vld [vmem:[%s2 + $0x78] sm:$0xff]
        %v698 = vld [vmem:[%s3] sm:$0xff]
        %v699 = vld [vmem:[%s3 + $0x8] sm:$0xff]
        %v700 = vld [vmem:[%s3 + $0x10] sm:$0xff]
        %v701 = vld [vmem:[%s3 + $0x18] sm:$0xff]
        %v702 = vld [vmem:[%s3 + $0x20] sm:$0xff]
        %v703 = vld [vmem:[%s3 + $0x28] sm:$0xff]
        %v704 = vld [vmem:[%s3 + $0x30] sm:$0xff]
        %v705 = vld [vmem:[%s3 + $0x38] sm:$0xff]
        %v706 = vld [vmem:[%s3 + $0x40] sm:$0xff]
        %v707 = vld [vmem:[%s3 + $0x48] sm:$0xff]
        %v708 = vld [vmem:[%s3 + $0x50] sm:$0xff]
        %v709 = vld [vmem:[%s3 + $0x58] sm:$0xff]
        %v710 = vld [vmem:[%s3 + $0x60] sm:$0xff]
        %v711 = vld [vmem:[%s3 + $0x68] sm:$0xff]
        %v712 = vld [vmem:[%s3 + $0x70] sm:$0xff]
        %v713 = vld [vmem:[%s3 + $0x78] sm:$0xff]
        %v730 = vunpack.c.l.b16 %v698
        %v731 = vunpack.c.h.b16 %v698
        %v732 = vunpack.c.l.b16 %v699
        %v733 = vunpack.c.h.b16 %v699
        %v734 = vunpack.c.l.b16 %v700
        %v735 = vunpack.c.h.b16 %v700
        %v736 = vunpack.c.l.b16 %v701
        %v737 = vunpack.c.h.b16 %v701
        %v738 = vunpack.c.l.b16 %v702
        %v739 = vunpack.c.h.b16 %v702
        %v740 = vunpack.c.l.b16 %v703
        %v741 = vunpack.c.h.b16 %v703
        %v742 = vunpack.c.l.b16 %v704
        %v743 = vunpack.c.h.b16 %v704
        %v744 = vunpack.c.l.b16 %v705
        %v745 = vunpack.c.h.b16 %v705
        %v746 = vunpack.c.l.b16 %v706
        %v747 = vunpack.c.h.b16 %v706
        %v748 = vunpack.c.l.b16 %v707
        %v749 = vunpack.c.h.b16 %v707
        %v750 = vunpack.c.l.b16 %v708
        %v751 = vunpack.c.h.b16 %v708
        %v752 = vunpack.c.l.b16 %v709
        %v753 = vunpack.c.h.b16 %v709
        %v754 = vunpack.c.l.b16 %v710
        %v755 = vunpack.c.h.b16 %v710
        %v756 = vunpack.c.l.b16 %v711
        %v757 = vunpack.c.h.b16 %v711
        %v758 = vunpack.c.l.b16 %v712
        %v759 = vunpack.c.h.b16 %v712
        %v760 = vunpack.c.l.b16 %v713
        %v761 = vunpack.c.h.b16 %v713
        %v762 = vpack.c.b16 %v732, %v730
        %v763 = vpack.c.b16 %v733, %v731
        %v764 = vpack.c.b16 %v736, %v734
        %v765 = vpack.c.b16 %v737, %v735
        %v766 = vpack.c.b16 %v740, %v738
        %v767 = vpack.c.b16 %v741, %v739
        %v768 = vpack.c.b16 %v744, %v742
        %v769 = vpack.c.b16 %v745, %v743
        %v770 = vpack.c.b16 %v748, %v746
        %v771 = vpack.c.b16 %v749, %v747
        %v772 = vpack.c.b16 %v752, %v750
        %v773 = vpack.c.b16 %v753, %v751
        %v774 = vpack.c.b16 %v756, %v754
        %v775 = vpack.c.b16 %v757, %v755
        %v776 = vpack.c.b16 %v760, %v758
        %v777 = vpack.c.b16 %v761, %v759
        %794 = vmatprep.subr.bf16.mxu0 %v777
        %795 = vmatpush1.bf16.msra.mxu0 %v776
        %796 = vmatprep.subr.bf16.mxu0 %v775
        %797 = vmatpush1.bf16.msra.mxu0 %v774
        %798 = vmatprep.subr.bf16.mxu0 %v773
        %799 = vmatpush1.bf16.msra.mxu0 %v772
        %800 = vmatprep.subr.bf16.mxu0 %v771
        %801 = vmatpush1.bf16.msra.mxu0 %v770
        %802 = vmatprep.subr.bf16.mxu0 %v769
        %803 = vmatpush1.bf16.msra.mxu0 %v768
        %804 = vmatprep.subr.bf16.mxu0 %v767
        %805 = vmatpush1.bf16.msra.mxu0 %v766
        %806 = vmatprep.subr.bf16.mxu0 %v765
        %807 = vmatpush1.bf16.msra.mxu0 %v764
        %808 = vmatprep.subr.bf16.mxu0 %v763
        %809 = vmatpush1.bf16.msra.mxu0 %v762
        %810 = vmatprep.subr.bf16.mxu0 0
        %811 = vmatpush2.bf16.msra.mxu0 0
        %812 = vmatprep.subr.bf16.mxu0 0
        %813 = vmatpush2.bf16.msra.mxu0 0
        %814 = vmatprep.subr.bf16.mxu0 0
        %815 = vmatpush2.bf16.msra.mxu0 0
        %816 = vmatprep.subr.bf16.mxu0 0
        %817 = vmatpush2.bf16.msra.mxu0 0
        %818 = vmatprep.subr.bf16.mxu0 0
        %819 = vmatpush2.bf16.msra.mxu0 0
        %820 = vmatprep.subr.bf16.mxu0 0
        %821 = vmatpush2.bf16.msra.mxu0 0
        %822 = vmatprep.subr.bf16.mxu0 0
        %823 = vmatpush2.bf16.msra.mxu0 0
        %824 = vmatprep.subr.bf16.mxu0 0
        %825 = vmatpush2.bf16.msra.mxu0 0
        %826 = vmatprep.mubr.bf16.mxu0 0
        %827 = vmatmul.mubr.bf16.gmra.mxu0 %v681
        %v828 = vpop.f32.mrf.mxu0
        %v829 = vadd.f32 0.0, %v828
        %v830 = vpop.f32.mrf.mxu0
        %v831 = vadd.f32 0.0, %v830
        %v832 = vpop.f32.mrf.mxu0
        %v833 = vpop.f32.mrf.mxu0
        %834 = vdwg.mxu0
        %v851 = vunpack.c.l.b16 %v682
        %v852 = vunpack.c.h.b16 %v682
        %v853 = vunpack.c.l.b16 %v683
        %v854 = vunpack.c.h.b16 %v683
        %v855 = vunpack.c.l.b16 %v684
        %v856 = vunpack.c.h.b16 %v684
        %v857 = vunpack.c.l.b16 %v685
        %v858 = vunpack.c.h.b16 %v685
        %v859 = vunpack.c.l.b16 %v686
        %v860 = vunpack.c.h.b16 %v686
        %v861 = vunpack.c.l.b16 %v687
        %v862 = vunpack.c.h.b16 %v687
        %v863 = vunpack.c.l.b16 %v688
        %v864 = vunpack.c.h.b16 %v688
        %v865 = vunpack.c.l.b16 %v689
        %v866 = vunpack.c.h.b16 %v689
        %v867 = vunpack.c.l.b16 %v690
        %v868 = vunpack.c.h.b16 %v690
        %v869 = vunpack.c.l.b16 %v691
        %v870 = vunpack.c.h.b16 %v691
        %v871 = vunpack.c.l.b16 %v692
        %v872 = vunpack.c.h.b16 %v692
        %v873 = vunpack.c.l.b16 %v693
        %v874 = vunpack.c.h.b16 %v693
        %v875 = vunpack.c.l.b16 %v694
        %v876 = vunpack.c.h.b16 %v694
        %v877 = vunpack.c.l.b16 %v695
        %v878 = vunpack.c.h.b16 %v695
        %v879 = vunpack.c.l.b16 %v696
        %v880 = vunpack.c.h.b16 %v696
        %v881 = vunpack.c.l.b16 %v697
        %v882 = vunpack.c.h.b16 %v697
        %v883 = vpack.c.b16 %v853, %v851
        %v884 = vpack.c.b16 %v854, %v852
        %v885 = vpack.c.b16 %v857, %v855
        %v886 = vpack.c.b16 %v858, %v856
        %v887 = vpack.c.b16 %v861, %v859
        %v888 = vpack.c.b16 %v862, %v860
        %v889 = vpack.c.b16 %v865, %v863
        %v890 = vpack.c.b16 %v866, %v864
        %v891 = vpack.c.b16 %v869, %v867
        %v892 = vpack.c.b16 %v870, %v868
        %v893 = vpack.c.b16 %v873, %v871
        %v894 = vpack.c.b16 %v874, %v872
        %v895 = vpack.c.b16 %v877, %v875
        %v896 = vpack.c.b16 %v878, %v876
        %v897 = vpack.c.b16 %v881, %v879
        %v898 = vpack.c.b16 %v882, %v880
        %915 = vmatprep.subr.bf16.mxu0 %v898
        %916 = vmatpush1.bf16.msra.mxu0 %v897
        %917 = vmatprep.subr.bf16.mxu0 %v896
        %918 = vmatpush1.bf16.msra.mxu0 %v895
        %919 = vmatprep.subr.bf16.mxu0 %v894
        %920 = vmatpush1.bf16.msra.mxu0 %v893
        %921 = vmatprep.subr.bf16.mxu0 %v892
        %922 = vmatpush1.bf16.msra.mxu0 %v891
        %923 = vmatprep.subr.bf16.mxu0 %v890
        %924 = vmatpush1.bf16.msra.mxu0 %v889
        %925 = vmatprep.subr.bf16.mxu0 %v888
        %926 = vmatpush1.bf16.msra.mxu0 %v887
        %927 = vmatprep.subr.bf16.mxu0 %v886
        %928 = vmatpush1.bf16.msra.mxu0 %v885
        %929 = vmatprep.subr.bf16.mxu0 %v884
        %930 = vmatpush1.bf16.msra.mxu0 %v883
        %931 = vmatprep.subr.bf16.mxu0 0
        %932 = vmatpush2.bf16.msra.mxu0 0
        %933 = vmatprep.subr.bf16.mxu0 0
        %934 = vmatpush2.bf16.msra.mxu0 0
        %935 = vmatprep.subr.bf16.mxu0 0
        %936 = vmatpush2.bf16.msra.mxu0 0
        %937 = vmatprep.subr.bf16.mxu0 0
        %938 = vmatpush2.bf16.msra.mxu0 0
        %939 = vmatprep.subr.bf16.mxu0 0
        %940 = vmatpush2.bf16.msra.mxu0 0
        %941 = vmatprep.subr.bf16.mxu0 0
        %942 = vmatpush2.bf16.msra.mxu0 0
        %943 = vmatprep.subr.bf16.mxu0 0
        %944 = vmatpush2.bf16.msra.mxu0 0
        %945 = vmatprep.subr.bf16.mxu0 0
        %946 = vmatpush2.bf16.msra.mxu0 0
        %947 = vmatprep.mubr.bf16.mxu0 0
        %948 = vmatmul.mubr.bf16.gmra.mxu0 %v576
        %v949 = vpop.f32.mrf.mxu0
        %v950 = vadd.f32 %v829, %v949
        %v951 = vpop.f32.mrf.mxu0
        %v952 = vadd.f32 %v831, %v951
        %v953 = vpop.f32.mrf.mxu0
        %v954 = vpop.f32.mrf.mxu0
        %955 = vdwg.mxu0
        %v956 = vld [vmem:[%s4] sm:$0x3]
        %v957 = vunpack.c.l.bf16 %v956
        %v959 = vlaneseq
        %v960 = vshrl.u32 %v959, 7
        %v961 = vsub.s32 0, %v960
        %v962 = vrot.slane %v957, %v961
        %v963 = vlaneseq
        %v964 = vshrl.u32 %v963, 7
        %v965 = vsub.s32 2, %v964
        %v966 = vrot.slane %v957, %v965
        %v969 = vlaneseq
        %v970 = vshrl.u32 %v969, 7
        %v971 = vsub.s32 0, %v970
        %v972 = vrot.slane %v962, %v971
        %v973 = vlaneseq
        %v974 = vshrl.u32 %v973, 7
        %v975 = vsub.s32 0, %v974
        %v976 = vrot.slane %v966, %v975
        %v977 = vadd.f32 %v950, %v972
        %v978 = vadd.f32 %v952, %v976
        %v979 = vxor.u32 %v977, 2147483648
        %v980 = vxor.u32 %v978, 2147483648
        %v981 = vmul.f32 %v979, 1.442695
        %v982 = vpow.pop %v981
        %v983 = vmul.f32 %v980, 1.442695
        %v984 = vpow.pop %v983
        %v985 = vadd.f32 %v982, 1.0
        %v986 = vadd.f32 %v984, 1.0
        %v987 = vrcp.pop %v985
        %v988 = vmul.f32 1.0, %v987
        %v989 = vrcp.pop %v986
        %v990 = vmul.f32 1.0, %v989
        %v991 = vmul.f32 %v977, %v988
        %v992 = vmul.f32 %v978, %v990
        %v993 = vpack.c.bf16 %v991, %v991
        %v994 = vpack.c.bf16 %v992, %v992
        %v995 = vld [vmem:[%s423] sm:$0xf]
        %v996 = vld [vmem:[%s423 + $0x4] sm:$0xf]
        %v997 = vld [vmem:[%s423 + $0x8] sm:$0xf]
        %v998 = vld [vmem:[%s423 + $0xc] sm:$0xf]
        %v999 = vld [vmem:[%s423 + $0x10] sm:$0xf]
        %v1000 = vld [vmem:[%s423 + $0x14] sm:$0xf]
        %v1001 = vld [vmem:[%s423 + $0x18] sm:$0xf]
        %v1002 = vld [vmem:[%s423 + $0x1c] sm:$0xf]
        %v1003 = vld [vmem:[%s423 + $0x20] sm:$0xf]
        %v1004 = vld [vmem:[%s423 + $0x24] sm:$0xf]
        %v1005 = vld [vmem:[%s423 + $0x28] sm:$0xf]
        %v1006 = vld [vmem:[%s423 + $0x2c] sm:$0xf]
        %v1007 = vld [vmem:[%s423 + $0x30] sm:$0xf]
        %v1008 = vld [vmem:[%s423 + $0x34] sm:$0xf]
        %v1009 = vld [vmem:[%s423 + $0x38] sm:$0xf]
        %v1010 = vld [vmem:[%s423 + $0x3c] sm:$0xf]
        %v1011 = vld [vmem:[%s423 + $0x40] sm:$0xf]
        %v1012 = vld [vmem:[%s423 + $0x44] sm:$0xf]
        %v1013 = vld [vmem:[%s423 + $0x48] sm:$0xf]
        %v1014 = vld [vmem:[%s423 + $0x4c] sm:$0xf]
        %v1015 = vld [vmem:[%s423 + $0x50] sm:$0xf]
        %v1016 = vld [vmem:[%s423 + $0x54] sm:$0xf]
        %v1017 = vld [vmem:[%s423 + $0x58] sm:$0xf]
        %v1018 = vld [vmem:[%s423 + $0x5c] sm:$0xf]
        %v1019 = vld [vmem:[%s423 + $0x60] sm:$0xf]
        %v1020 = vld [vmem:[%s423 + $0x64] sm:$0xf]
        %v1021 = vld [vmem:[%s423 + $0x68] sm:$0xf]
        %v1022 = vld [vmem:[%s423 + $0x6c] sm:$0xf]
        %v1023 = vld [vmem:[%s423 + $0x70] sm:$0xf]
        %v1024 = vld [vmem:[%s423 + $0x74] sm:$0xf]
        %v1025 = vld [vmem:[%s423 + $0x78] sm:$0xf]
        %v1026 = vld [vmem:[%s423 + $0x7c] sm:$0xf]
        %v1027 = vld [vmem:[%s457] sm:$0x1]
        %v1028 = vunpack.c.l.bf16 %v1027
        %v1029 = vlaneseq
        %v1030 = vshrl.u32 %v1029, 7
        %v1031 = vsub.s32 0, %v1030
        %v1032 = vrot.slane %v1028, %v1031
        %v1065 = vunpack.c.l.b16 %v995
        %v1066 = vunpack.c.l.b16 %v996
        %v1067 = vunpack.c.l.b16 %v997
        %v1068 = vunpack.c.l.b16 %v998
        %v1069 = vunpack.c.l.b16 %v999
        %v1070 = vunpack.c.l.b16 %v1000
        %v1071 = vunpack.c.l.b16 %v1001
        %v1072 = vunpack.c.l.b16 %v1002
        %v1073 = vunpack.c.l.b16 %v1003
        %v1074 = vunpack.c.l.b16 %v1004
        %v1075 = vunpack.c.l.b16 %v1005
        %v1076 = vunpack.c.l.b16 %v1006
        %v1077 = vunpack.c.l.b16 %v1007
        %v1078 = vunpack.c.l.b16 %v1008
        %v1079 = vunpack.c.l.b16 %v1009
        %v1080 = vunpack.c.l.b16 %v1010
        %v1081 = vunpack.c.l.b16 %v1011
        %v1082 = vunpack.c.l.b16 %v1012
        %v1083 = vunpack.c.l.b16 %v1013
        %v1084 = vunpack.c.l.b16 %v1014
        %v1085 = vunpack.c.l.b16 %v1015
        %v1086 = vunpack.c.l.b16 %v1016
        %v1087 = vunpack.c.l.b16 %v1017
        %v1088 = vunpack.c.l.b16 %v1018
        %v1089 = vunpack.c.l.b16 %v1019
        %v1090 = vunpack.c.l.b16 %v1020
        %v1091 = vunpack.c.l.b16 %v1021
        %v1092 = vunpack.c.l.b16 %v1022
        %v1093 = vunpack.c.l.b16 %v1023
        %v1094 = vunpack.c.l.b16 %v1024
        %v1095 = vunpack.c.l.b16 %v1025
        %v1096 = vunpack.c.l.b16 %v1026
        %v1097 = vpack.c.b16 %v1066, %v1065
        %v1098 = vpack.c.b16 %v1068, %v1067
        %v1099 = vpack.c.b16 %v1070, %v1069
        %v1100 = vpack.c.b16 %v1072, %v1071
        %v1101 = vpack.c.b16 %v1074, %v1073
        %v1102 = vpack.c.b16 %v1076, %v1075
        %v1103 = vpack.c.b16 %v1078, %v1077
        %v1104 = vpack.c.b16 %v1080, %v1079
        %v1105 = vpack.c.b16 %v1082, %v1081
        %v1106 = vpack.c.b16 %v1084, %v1083
        %v1107 = vpack.c.b16 %v1086, %v1085
        %v1108 = vpack.c.b16 %v1088, %v1087
        %v1109 = vpack.c.b16 %v1090, %v1089
        %v1110 = vpack.c.b16 %v1092, %v1091
        %v1111 = vpack.c.b16 %v1094, %v1093
        %v1112 = vpack.c.b16 %v1096, %v1095
        %1129 = vmatprep.subr.bf16.mxu0 0
        %1130 = vmatpush1.bf16.msra.mxu0 %v1104
        %1131 = vmatprep.subr.bf16.mxu0 0
        %1132 = vmatpush1.bf16.msra.mxu0 %v1103
        %1133 = vmatprep.subr.bf16.mxu0 0
        %1134 = vmatpush1.bf16.msra.mxu0 %v1102
        %1135 = vmatprep.subr.bf16.mxu0 0
        %1136 = vmatpush1.bf16.msra.mxu0 %v1101
        %1137 = vmatprep.subr.bf16.mxu0 0
        %1138 = vmatpush1.bf16.msra.mxu0 %v1100
        %1139 = vmatprep.subr.bf16.mxu0 0
        %1140 = vmatpush1.bf16.msra.mxu0 %v1099
        %1141 = vmatprep.subr.bf16.mxu0 0
        %1142 = vmatpush1.bf16.msra.mxu0 %v1098
        %1143 = vmatprep.subr.bf16.mxu0 0
        %1144 = vmatpush1.bf16.msra.mxu0 %v1097
        %1145 = vmatprep.subr.bf16.mxu0 0
        %1146 = vmatpush2.bf16.msra.mxu0 %v1112
        %1147 = vmatprep.subr.bf16.mxu0 0
        %1148 = vmatpush2.bf16.msra.mxu0 %v1111
        %1149 = vmatprep.subr.bf16.mxu0 0
        %1150 = vmatpush2.bf16.msra.mxu0 %v1110
        %1151 = vmatprep.subr.bf16.mxu0 0
        %1152 = vmatpush2.bf16.msra.mxu0 %v1109
        %1153 = vmatprep.subr.bf16.mxu0 0
        %1154 = vmatpush2.bf16.msra.mxu0 %v1108
        %1155 = vmatprep.subr.bf16.mxu0 0
        %1156 = vmatpush2.bf16.msra.mxu0 %v1107
        %1157 = vmatprep.subr.bf16.mxu0 0
        %1158 = vmatpush2.bf16.msra.mxu0 %v1106
        %1159 = vmatprep.subr.bf16.mxu0 0
        %1160 = vmatpush2.bf16.msra.mxu0 %v1105
        %1161 = vmatprep.mubr.bf16.mxu0 %v994
        %1162 = vmatmul.mubr.bf16.gmra.mxu0 %v993
        %v1163 = vpop.f32.mrf.mxu0
        %v1164 = vadd.f32 %v1032, %v1163
        %v1165 = vpop.f32.mrf.mxu0
        %v1166 = vpop.f32.mrf.mxu0
        %v1167 = vpop.f32.mrf.mxu0
        %1168 = vdwg.mxu0
        %1169 = vst [vmem:[%s454] sm:$0xff] %v1164
        %s1170 = sand.u32 %s186, 1
        %s1171 = scalar_lea.sflag [#allocation4], %s1170
        %s1172 = sand.u32 %s186, 1
        %s1173 = smul.addr %s1172, 8
        %s1174 = scalar_lea.vmem [#allocation3], %s1173
        // Predicated region
        $region90: #{timestep_embedder.1} parent=84 // pred_check
          %p1175 = pneg %p196
        $region91: #{timestep_embedder.1} parent=84 // pred_check_branch
          %1177 = sbr.rel (%p1175) target = $region93
        $region92: #{timestep_embedder.1} parent=84 // pred_region
          %s1179 = ssub.s32 128, 128
          %1180 = vsyncadd %s1171, %s1179
          %s1181 = smul.addr %s21, 128
          %s1182 = scalar_lea.hbm %s7, %s1181
          %s1184 = sshll.u32 %s1174, 4
          %s1185 = int_to_ptr.vmem [resolvable:$true] %s1184
          %1187 = dma.vmem_to_hbm [thread:$0]  %s1185, 128, %s1182, %s1171
        $region93: #{timestep_embedder.1} parent=84 // pred_fallthru
          _
      $region85: #{timestep_embedder.1} parent=5 // pred_fallthru
        _
      %p1188 = scmp.le.s32.totalorder 2, %s16
      // Predicated region
      $region94: #{timestep_embedder.1} parent=5 // pred_check
        %p1189 = pneg %p1188
      $region95: #{timestep_embedder.1} parent=5 // pred_check_branch
        %1191 = sbr.rel (%p1189) target = $region97
      $region96: #{timestep_embedder.1} parent=5 // pred_region
        %s1192 = ssub.s32 %s16, 2
        // Predicated region
        $region98: #{timestep_embedder.1} parent=96 // pred_check
          %p1193 = pneg %p202
        $region99: #{timestep_embedder.1} parent=96 // pred_check_branch
          %1195 = sbr.rel (%p1193) target = $region101
        $region100: #{timestep_embedder.1} parent=96 // pred_region
          %s1196 = sand.u32 %s187, 1
          %s1197 = scalar_lea.sflag [#allocation4], %s1196
          %s1198 = sand.u32 %s187, 1
          %s1199 = smul.addr %s1198, 8
          %s1200 = scalar_lea.vmem [#allocation3], %s1199
          %1201 = dma.done %s1197, 128
        $region101: #{timestep_embedder.1} parent=96 // pred_fallthru
          _
      $region97: #{timestep_embedder.1} parent=5 // pred_fallthru
        _
    $region6: #{timestep_embedder.1} parent=1 // loop_footer
      %s20 = sadd.s32 1, %s16
    $region7: #{timestep_embedder.1} parent=1 // loop_footer_branch
      %15 = sbr.rel target = $region3
    $region8: #{timestep_embedder.1} parent=1 // loop_exit
      _
    %1202 = vsyncpa [#allocation4], 1
    %s1203 = scalar_lea.sflag [#allocation4], 1
    %1204 = vsyncpa %s1203, 1

</llo_original>
